<compile_context>
chip_gen: v6e
topology: v6e:2x2x1
jax: 0.10.0
libtpu: 0.0.40
codegen_flags: <defaults>
</compile_context>

<pallas_src>
import functools

import jax
import jax.numpy as jnp
from jax.experimental import pallas as pl
from jax.experimental.pallas import tpu as pltpu

EPS = 1e-7
LANE = 128
SUBLANE = 8


def _round_up(x, m):
    return ((x + m - 1) // m) * m


def _focal_loss_kernel(logits_ref, target_ref, acc_ref, *, beta, gamma, n_valid,
                       tm, tiles_per_chunk, needs_mask):
    c = pl.program_id(0)   # chunk ("parallel" axis; per-TC on v7x)
    i = pl.program_id(1)   # tile within chunk ("arbitrary" reduction axis)

    # Zero the resident per-chunk accumulator at the start of each chunk.
    @pl.when(i == 0)
    def _init():
        acc_ref[...] = jnp.zeros_like(acc_ref)

    # Elementwise hot path in f32 (inputs stream in native dtype).
    x = logits_ref[...].astype(jnp.float32)
    t = target_ref[...].astype(jnp.float32)

    sig = jax.nn.sigmoid(x)
    log_p = jnp.maximum(jnp.log(sig + EPS), -100.0)        # clamp(min=-100)
    log_1mp = jnp.maximum(jnp.log(1.0 - sig + EPS), -100.0)
    log_probs = t * log_p + beta * (1.0 - t) * log_1mp

    one_minus_p = 1.0 - jnp.exp(log_probs)
    if gamma == 1.0:                 # trace-time specialization: skip EUP pow
        focal = one_minus_p
    elif gamma == 2.0:
        focal = one_minus_p * one_minus_p
    else:
        focal = one_minus_p ** gamma
    loss = -focal * log_probs        # (tm, 128) f32

    def _accumulate(vals):
        # (tm, 128) -> (tm//8, 8, 128) -> sum over leading axis: plain vreg adds
        # (VPU); no per-step cross-lane XLU reduce.
        acc_ref[...] += vals.reshape(-1, SUBLANE, LANE).sum(axis=0)

    if not needs_mask:
        _accumulate(loss)
    else:
        # Logical tile index (may exceed the clamped DMA block index for grid
        # overshoot steps; those tiles mask to zero below).
        tile_idx = c * tiles_per_chunk + i
        row_start = tile_idx * tm            # global 128-lane row of first tile row
        n_full_rows = n_valid // LANE        # Python ints (row-based: no int32
        rem = n_valid % LANE                 # flat-index overflow for huge N)

        tile_is_clean = (row_start + tm) <= n_full_rows

        @pl.when(tile_is_clean)
        def _full():
            _accumulate(loss)

        @pl.when(jnp.logical_not(tile_is_clean))
        def _tail():
            rows = jax.lax.broadcasted_iota(jnp.int32, (tm, LANE), 0) + row_start
            if rem == 0:
                valid = rows < n_full_rows
            else:
                cols = jax.lax.broadcasted_iota(jnp.int32, (tm, LANE), 1)
                valid = (rows < n_full_rows) | ((rows == n_full_rows) & (cols < rem))
            _accumulate(jnp.where(valid, loss, 0.0))


def focal_loss_selective(logits, target, *, beta, gamma=1.0, tm_max=1024):
    """Mean focal selective loss over all elements (matches reductions='mean')."""
    assert logits.shape == target.shape
    n = int(logits.size)
    assert n > 0

    # Flatten in native dtype; reshape is free. Pad only the ragged lane remainder.
    flat_l = logits.reshape(-1)
    flat_t = target.reshape(-1)
    lane_pad = (-n) % LANE
    if lane_pad:
        flat_l = jnp.concatenate([flat_l, jnp.zeros((lane_pad,), flat_l.dtype)])
        flat_t = jnp.concatenate([flat_t, jnp.zeros((lane_pad,), flat_t.dtype)])

    m = (n + lane_pad) // LANE
    l2 = flat_l.reshape(m, LANE)
    t2 = flat_t.reshape(m, LANE)

    # Tile sizing: <=1024 rows (0.5 MiB f32 per input per buffer) keeps the
    # double-buffered working set small on all of v5e/v6e/v7x.
    tm = min(tm_max, _round_up(m, SUBLANE))
    num_tiles = pl.cdiv(m, tm)
    nc = 2 if num_tiles >= 2 else 1          # "parallel" chunks (2 TCs on v7x)
    tiles_per_chunk = pl.cdiv(num_tiles, nc)

    covered_rows = nc * tiles_per_chunk * tm
    needs_mask = (covered_rows * LANE) != n  # static: skip mask when exact fit

    def in_index_map(c, i):
        # Clamp so overshoot grid steps never issue fully out-of-bounds DMAs;
        # their contribution is masked to zero in the kernel.
        return (jnp.minimum(c * tiles_per_chunk + i, num_tiles - 1), 0)

    kernel = functools.partial(
        _focal_loss_kernel,
        beta=float(beta), gamma=float(gamma), n_valid=n, tm=tm,
        tiles_per_chunk=tiles_per_chunk, needs_mask=needs_mask)

    partials = pl.pallas_call(
        kernel,
        out_shape=jax.ShapeDtypeStruct((nc * SUBLANE, LANE), jnp.float32),
        grid_spec=pltpu.PrefetchScalarGridSpec(
            num_scalar_prefetch=0,
            grid=(nc, tiles_per_chunk),
            in_specs=[pl.BlockSpec((tm, LANE), in_index_map),
                      pl.BlockSpec((tm, LANE), in_index_map)],
            out_specs=pl.BlockSpec((SUBLANE, LANE), lambda c, i: (c, 0)),
        ),
        compiler_params=pltpu.CompilerParams(
            dimension_semantics=("parallel", "arbitrary")),
    )(l2, t2)

    # Tiny final reduce + 1/N scale (tree-reduced in f32 by XLA).
    return jnp.sum(partials) * jnp.float32(1.0 / n)


def _reference(logits, target, beta, gamma):
    sig = jax.nn.sigmoid(logits.astype(jnp.float32))
    t = target.astype(jnp.float32)
    lp = t * jnp.maximum(jnp.log(sig + EPS), -100.0) + beta * (1.0 - t) * jnp.maximum(
        jnp.log(1.0 - sig + EPS), -100.0)
    loss = -1.0 * (1.0 - jnp.exp(lp)) ** gamma * lp
    return loss.mean()


if __name__ == "__main__":
    key = jax.random.PRNGKey(0)
    k1, k2, k3, k4 = jax.random.split(key, 4)

    # Small selector-head NCHW shape (single-tile, no masking path).
    shape = (2, 4, 16, 16)
    logits = jax.random.normal(k1, shape, dtype=jnp.float32) * 2.0
    target = (jax.random.uniform(k2, shape) > 0.5).astype(jnp.float32)
    beta, gamma = 0.5, 1.0

    loss = focal_loss_selective(logits, target, beta=beta, gamma=gamma)
    jax.block_until_ready(loss)
    ref = _reference(logits, target, beta, gamma)
    assert jnp.allclose(loss, ref, rtol=1e-5, atol=1e-5), (loss, ref)

    # Ragged shape exercising multi-tile pipeline, parallel chunks, overshoot
    # clamping and tail masking (gamma=2 specialization).
    shape2 = (4, 5, 120, 113)
    logits2 = jax.random.normal(k3, shape2, dtype=jnp.float32) * 2.0
    target2 = (jax.random.uniform(k4, shape2) > 0.5).astype(jnp.float32)
    beta2, gamma2 = 0.7, 2.0

    loss2 = focal_loss_selective(logits2, target2, beta=beta2, gamma=gamma2)
    jax.block_until_ready(loss2)
    ref2 = _reference(logits2, target2, beta2, gamma2)
    assert jnp.allclose(loss2, ref2, rtol=1e-5, atol=1e-5), (loss2, ref2)

    print("KERNEL_OK")
</pallas_src>

<mosaic_0001>
module attributes {stable_mosaic.version = 11 : i64} {
  func.func @_focal_loss_kernel(%arg0: i32, %arg1: i32, %arg2: memref<16x128xf32, #tpu.memory_space<vmem>>, %arg3: memref<16x128xf32, #tpu.memory_space<vmem>>, %arg4: memref<8x128xf32, #tpu.memory_space<vmem>>) attributes {dimension_semantics = [#tpu.dimension_semantics<parallel>, #tpu.dimension_semantics<arbitrary>], iteration_bounds = array<i64: 1, 1>, scalar_prefetch = 0 : i64, scratch_operands = 0 : i64, tpu.core_type = #tpu.core_type<tc>, window_params = [{transform_indices = @transform_0, window_bounds = array<i64: 16, 128>}, {transform_indices = @transform_1, window_bounds = array<i64: 16, 128>}, {transform_indices = @transform_2, window_bounds = array<i64: 8, 128>}]} {
    %c0_i32 = arith.constant 0 : i32
    %0 = arith.cmpi eq, %arg1, %c0_i32 : i32
    %1 = arith.extui %0 : i1 to i32
    %c0_i32_0 = arith.constant 0 : i32
    %2 = arith.cmpi ne, %1, %c0_i32_0 : i32
    scf.if %2 {
      %cst_18 = arith.constant 0.000000e+00 : f32
      %40 = vector.broadcast %cst_18 : f32 to vector<8x128xf32>
      %c0_19 = arith.constant 0 : index
      %c0_20 = arith.constant 0 : index
      %41 = vector.load %arg4[%c0_19, %c0_20] : memref<8x128xf32, #tpu.memory_space<vmem>>, vector<8x128xf32>
      tpu.vector_store %arg4[%c0_19, %c0_20], %40 {strides = array<i32>} : memref<8x128xf32, #tpu.memory_space<vmem>>, vector<8x128xf32>,
    } else {
    }
    %c0 = arith.constant 0 : index
    %c0_1 = arith.constant 0 : index
    %3 = vector.load %arg2[%c0, %c0_1] : memref<16x128xf32, #tpu.memory_space<vmem>>, vector<16x128xf32>
    %c0_2 = arith.constant 0 : index
    %c0_3 = arith.constant 0 : index
    %4 = vector.load %arg3[%c0_2, %c0_3] : memref<16x128xf32, #tpu.memory_space<vmem>>, vector<16x128xf32>
    %5 = arith.negf %3 : vector<16x128xf32>
    %6 = math.exp %5 : vector<16x128xf32>
    %cst = arith.constant 1.000000e+00 : f32
    %7 = vector.broadcast %cst : f32 to vector<16x128xf32>
    %8 = arith.addf %7, %6 : vector<16x128xf32>
    %9 = arith.divf %7, %8 : vector<16x128xf32>
    %cst_4 = arith.constant 1.000000e-07 : f32
    %10 = vector.broadcast %cst_4 : f32 to vector<16x128xf32>
    %11 = arith.addf %9, %10 : vector<16x128xf32>
    %12 = math.log %11 : vector<16x128xf32>
    %cst_5 = arith.constant -1.000000e+02 : f32
    %13 = vector.broadcast %cst_5 : f32 to vector<16x128xf32>
    %14 = arith.maximumf %12, %13 : vector<16x128xf32>
    %cst_6 = arith.constant 1.000000e+00 : f32
    %15 = vector.broadcast %cst_6 : f32 to vector<16x128xf32>
    %16 = arith.subf %15, %9 : vector<16x128xf32>
    %cst_7 = arith.constant 1.000000e-07 : f32
    %17 = vector.broadcast %cst_7 : f32 to vector<16x128xf32>
    %18 = arith.addf %16, %17 : vector<16x128xf32>
    %19 = math.log %18 : vector<16x128xf32>
    %cst_8 = arith.constant -1.000000e+02 : f32
    %20 = vector.broadcast %cst_8 : f32 to vector<16x128xf32>
    %21 = arith.maximumf %19, %20 : vector<16x128xf32>
    %22 = arith.mulf %4, %14 : vector<16x128xf32>
    %cst_9 = arith.constant 1.000000e+00 : f32
    %23 = vector.broadcast %cst_9 : f32 to vector<16x128xf32>
    %24 = arith.subf %23, %4 : vector<16x128xf32>
    %cst_10 = arith.constant 5.000000e-01 : f32
    %25 = vector.broadcast %cst_10 : f32 to vector<16x128xf32>
    %26 = arith.mulf %25, %24 : vector<16x128xf32>
    %27 = arith.mulf %26, %21 : vector<16x128xf32>
    %28 = arith.addf %22, %27 : vector<16x128xf32>
    %29 = math.exp %28 : vector<16x128xf32>
    %cst_11 = arith.constant 1.000000e+00 : f32
    %30 = vector.broadcast %cst_11 : f32 to vector<16x128xf32>
    %31 = arith.subf %30, %29 : vector<16x128xf32>
    %cst_12 = arith.constant 0.000000e+00 : f32
    %32 = vector.broadcast %cst_12 : f32 to vector<16x128xf32>
    %33 = arith.subf %32, %31 : vector<16x128xf32>
    %34 = arith.mulf %33, %28 : vector<16x128xf32>
    %c0_13 = arith.constant 0 : index
    %c0_14 = arith.constant 0 : index
    %35 = vector.load %arg4[%c0_13, %c0_14] : memref<8x128xf32, #tpu.memory_space<vmem>>, vector<8x128xf32>
    %36 = vector.shape_cast %34 : vector<16x128xf32> to vector<2x8x128xf32>
    %cst_15 = arith.constant dense<0.000000e+00> : vector<8x128xf32>
    %37 = vector.multi_reduction <add>, %36, %cst_15 [0] : vector<2x8x128xf32> to vector<8x128xf32>
    %38 = arith.addf %35, %37 : vector<8x128xf32>
    %c0_16 = arith.constant 0 : index
    %c0_17 = arith.constant 0 : index
    %39 = vector.load %arg4[%c0_16, %c0_17] : memref<8x128xf32, #tpu.memory_space<vmem>>, vector<8x128xf32>
    tpu.vector_store %arg4[%c0_16, %c0_17], %38 {strides = array<i32>} : memref<8x128xf32, #tpu.memory_space<vmem>>, vector<8x128xf32>,
    return
  }
  func.func @transform_0(%arg0: i32, %arg1: i32) -> (i32, i32) {
    %c1_i32 = arith.constant 1 : i32
    %0 = arith.muli %arg0, %c1_i32 : i32
    %1 = arith.addi %0, %arg1 : i32
    %c0_i32 = arith.constant 0 : i32
    %2 = arith.minsi %1, %c0_i32 : i32
    %c0_i32_0 = arith.constant 0 : i32
    %c0_i32_1 = arith.constant 0 : i32
    return %2, %c0_i32_0 : i32, i32
  }
  func.func @transform_1(%arg0: i32, %arg1: i32) -> (i32, i32) {
    %c1_i32 = arith.constant 1 : i32
    %0 = arith.muli %arg0, %c1_i32 : i32
    %1 = arith.addi %0, %arg1 : i32
    %c0_i32 = arith.constant 0 : i32
    %2 = arith.minsi %1, %c0_i32 : i32
    %c0_i32_0 = arith.constant 0 : i32
    %c0_i32_1 = arith.constant 0 : i32
    return %2, %c0_i32_0 : i32, i32
  }
  func.func @transform_2(%arg0: i32, %arg1: i32) -> (i32, i32) {
    %c0_i32 = arith.constant 0 : i32
    %c0_i32_0 = arith.constant 0 : i32
    return %arg0, %c0_i32 : i32, i32
  }
}

</mosaic_0001>

<llo_original>
// kernel: tpu_custom_call.1
$region0: #{tpu_custom_call.1}
  #allocation0 [shape = 'u32[]', space=smem, size = 0x4, offset = 0x4, fixed_abs, tag = 'smem constant byte address 0x4 - core index']
  #allocation1 [shape = 'u32[144,128]{1,0:T(1,128)}', space=vmem, size = 0x12000, scoped, tag = 'internal scratch']
  %s0 = inlined_call_operand.hbm [shape: f32[16,128], index: 0, kind: input, shape index: {}]
  %s1 = inlined_call_operand.hbm [shape: f32[16,128], index: 1, kind: input, shape index: {}]
  %s2 = inlined_call_operand.hbm [shape: f32[8,128], index: 2, kind: output, shape index: {}]
  %s3 = sld [smem:[#allocation0]]
  $region30: #{tpu_custom_call.1} parent=0
    _
  %s5 = ssub.s32 1, %s3
  %s6 = scalar_select 0, %s5, %s3
  $region1: #{tpu_custom_call.1} parent=0
    #allocation2 [shape = 'u8[8192]{0}', space=vmem, size = 0x2000, scoped, tag = 'input window, operand 0, single buffered']
    #allocation3 [shape = 's32[1]{0}', space=sflag, size = 0x4, scoped, tag = 'scoped memory for tpu_custom_call.1']
    #allocation4 [shape = 's32[1]{0}', space=sflag, size = 0x4, scoped, tag = 'scoped memory for tpu_custom_call.1']
    #allocation5 [shape = 'u8[8192]{0}', space=vmem, size = 0x2000, scoped, tag = 'input window, operand 1, single buffered']
    #allocation6 [shape = 's32[1]{0}', space=sflag, size = 0x4, scoped, tag = 'scoped memory for tpu_custom_call.1']
    #allocation7 [shape = 'u8[4096]{0}', space=vmem, size = 0x1000, scoped, tag = 'output window, operand 0, single buffered']
    %7 = vsyncpa [#allocation3], 0
    %8 = vsyncpa [#allocation6], 0
    %9 = vsyncpa [#allocation4], 0
    // Predicated region
    $region2: #{tpu_custom_call.1} parent=1 // pred_check
      _
    $region3: #{tpu_custom_call.1} parent=1 // pred_check_branch
      %11 = sbr.rel (0) target = $region5
    $region4: #{tpu_custom_call.1} parent=1 // pred_region
      %s12 = sadd.s32 0, 0
      %p13 = scmp.lt.s32.totalorder %s12, 0
      %s14 = scalar_select %p13, %s12, 0
      %s15 = smul.u32 2, %s14
      %s17 = ssub.s32 256, 256
      %18 = vsyncadd [#allocation3], %s17
      %s19 = smul.addr %s15, 128
      %s20 = scalar_lea.hbm %s0, %s19
      %s21 = sshll.u32 [#allocation2], 4
      %s22 = int_to_ptr.vmem [resolvable:$true] %s21
      %27 = dma.hbm_to_vmem [thread:$0]  %s20, 256, %s22, [#allocation3], 128, 128, 8
    $region5: #{tpu_custom_call.1} parent=1 // pred_fallthru
      _
    // Predicated region
    $region6: #{tpu_custom_call.1} parent=1 // pred_check
      _
    $region7: #{tpu_custom_call.1} parent=1 // pred_check_branch
      %29 = sbr.rel (0) target = $region9
    $region8: #{tpu_custom_call.1} parent=1 // pred_region
      %s30 = sadd.s32 0, 0
      %p31 = scmp.lt.s32.totalorder %s30, 0
      %s32 = scalar_select %p31, %s30, 0
      %s33 = smul.u32 2, %s32
      %s35 = ssub.s32 256, 256
      %36 = vsyncadd [#allocation6], %s35
      %s37 = smul.addr %s33, 128
      %s38 = scalar_lea.hbm %s1, %s37
      %s39 = sshll.u32 [#allocation5], 4
      %s40 = int_to_ptr.vmem [resolvable:$true] %s39
      %45 = dma.hbm_to_vmem [thread:$0]  %s38, 256, %s40, [#allocation6], 128, 128, 8
    $region9: #{tpu_custom_call.1} parent=1 // pred_fallthru
      _
    // Predicated region
    $region10: #{tpu_custom_call.1} parent=1 // pred_check
      _
    $region11: #{tpu_custom_call.1} parent=1 // pred_check_branch
      %47 = sbr.rel (0) target = $region13
    $region12: #{tpu_custom_call.1} parent=1 // pred_region
      %48 = dma.done [#allocation3], 256
    $region13: #{tpu_custom_call.1} parent=1 // pred_fallthru
      _
    // Predicated region
    $region14: #{tpu_custom_call.1} parent=1 // pred_check
      _
    $region15: #{tpu_custom_call.1} parent=1 // pred_check_branch
      %50 = sbr.rel (0) target = $region17
    $region16: #{tpu_custom_call.1} parent=1 // pred_region
      %51 = dma.done [#allocation6], 256
    $region17: #{tpu_custom_call.1} parent=1 // pred_fallthru
      _
    %s52 = sadd.s32 0, 0
    %p53 = scmp.lt.s32.totalorder %s52, 0
    %s54 = scalar_select %p53, %s52, 0
    %s55 = smul.u32 2, %s54
    %s56 = sadd.s32 0, 0
    %p57 = scmp.lt.s32.totalorder %s56, 0
    %s58 = scalar_select %p57, %s56, 0
    %s59 = smul.u32 2, %s58
    %p60 = scmp.eq.s32.totalorder 0, 0
    // Predicated region
    $region18: #{tpu_custom_call.1} parent=1 // pred_check
      %p61 = pneg %p60
    $region19: #{tpu_custom_call.1} parent=1 // pred_check_branch
      %63 = sbr.rel (%p61) target = $region21
    $region20: #{tpu_custom_call.1} parent=1 // pred_region
      %64 = vst [vmem:[#allocation7] sm:$0xff] 0.0
    $region21: #{tpu_custom_call.1} parent=1 // pred_fallthru
      _
    %v65 = vld [vmem:[#allocation2] sm:$0xff]
    %v66 = vld [vmem:[#allocation2 + $0x8] sm:$0xff]
    %v67 = vld [vmem:[#allocation5] sm:$0xff]
    %v68 = vld [vmem:[#allocation5 + $0x8] sm:$0xff]
    %v69 = vxor.u32 %v65, 2147483648
    %v70 = vxor.u32 %v66, 2147483648
    %v71 = vmul.f32 %v69, 1.442695
    %v72 = vpow.pop %v71
    %v73 = vmul.f32 %v70, 1.442695
    %v74 = vpow.pop %v73
    %v75 = vadd.f32 %v72, 1.0
    %v76 = vadd.f32 %v74, 1.0
    %v77 = vrcp.pop %v75
    %v78 = vmul.f32 1.0, %v77
    %v79 = vrcp.pop %v76
    %v80 = vmul.f32 1.0, %v79
    %v81 = vadd.f32 %v78, 1e-07
    %v82 = vadd.f32 %v80, 1e-07
    %v83 = vlog2.pop %v81
    %v84 = vmul.f32 %v83, 0.6931472
    %v85 = vlog2.pop %v82
    %v86 = vmul.f32 %v85, 0.6931472
    %v87 = vmax.f32 %v84, -100.0
    %v88 = vmax.f32 %v86, -100.0
    %v89 = vsub.f32 1.0, %v78
    %v90 = vsub.f32 1.0, %v80
    %v91 = vadd.f32 %v89, 1e-07
    %v92 = vadd.f32 %v90, 1e-07
    %v93 = vlog2.pop %v91
    %v94 = vmul.f32 %v93, 0.6931472
    %v95 = vlog2.pop %v92
    %v96 = vmul.f32 %v95, 0.6931472
    %v97 = vmax.f32 %v94, -100.0
    %v98 = vmax.f32 %v96, -100.0
    %v99 = vmul.f32 %v67, %v87
    %v100 = vmul.f32 %v68, %v88
    %v101 = vsub.f32 1.0, %v67
    %v102 = vsub.f32 1.0, %v68
    %v103 = vmul.f32 %v101, 0.5
    %v104 = vmul.f32 %v102, 0.5
    %v105 = vmul.f32 %v103, %v97
    %v106 = vmul.f32 %v104, %v98
    %v107 = vadd.f32 %v99, %v105
    %v108 = vadd.f32 %v100, %v106
    %v109 = vmul.f32 %v107, 1.442695
    %v110 = vpow.pop %v109
    %v111 = vmul.f32 %v108, 1.442695
    %v112 = vpow.pop %v111
    %v113 = vsub.f32 1.0, %v110
    %v114 = vsub.f32 1.0, %v112
    %v115 = vsub.f32 0.0, %v113
    %v116 = vsub.f32 0.0, %v114
    %v117 = vmul.f32 %v115, %v107
    %v118 = vmul.f32 %v116, %v108
    %v119 = vld [vmem:[#allocation7] sm:$0xff]
    %v120 = vadd.f32 %v117, %v118
    %v121 = vadd.f32 %v119, %v120
    %122 = vst [vmem:[#allocation7] sm:$0xff] %v121
    // Predicated region
    $region22: #{tpu_custom_call.1} parent=1 // pred_check
      _
    $region23: #{tpu_custom_call.1} parent=1 // pred_check_branch
      %124 = sbr.rel (0) target = $region25
    $region24: #{tpu_custom_call.1} parent=1 // pred_region
      %s126 = ssub.s32 128, 128
      %127 = vsyncadd [#allocation4], %s126
      %s129 = sshll.u32 [#allocation7], 4
      %s130 = int_to_ptr.vmem [resolvable:$true] %s129
      %132 = dma.vmem_to_hbm [thread:$0]  %s130, 128, %s2, [#allocation4]
    $region25: #{tpu_custom_call.1} parent=1 // pred_fallthru
      _
    // Predicated region
    $region26: #{tpu_custom_call.1} parent=1 // pred_check
      _
    $region27: #{tpu_custom_call.1} parent=1 // pred_check_branch
      %134 = sbr.rel (0) target = $region29
    $region28: #{tpu_custom_call.1} parent=1 // pred_region
      %135 = dma.done [#allocation4], 128
    $region29: #{tpu_custom_call.1} parent=1 // pred_fallthru
      _
    %136 = vsyncpa [#allocation3], 1
    %137 = vsyncpa [#allocation6], 1
    %138 = vsyncpa [#allocation4], 1

</llo_original>
